<compile_context>
chip_gen: v7x
topology: tpu7x:2x2x1
jax: 0.10.0
libtpu: 0.0.40
codegen_flags: <defaults>
</compile_context>

<pallas_src>
import math
from functools import partial

import jax
import jax.numpy as jnp
from jax import lax
from jax.experimental import pallas as pl
from jax.experimental.pallas import tpu as pltpu


_LANE_CHUNK = 256  # points per inner step (multiple of 128; keeps vregs bounded)


def _round_up(v, m):
    return ((v + m - 1) // m) * m


# ----------------------------------------------------------------------------
# Kernel
# ----------------------------------------------------------------------------
def _herglotz_kernel(x_ref, w_ref, o_ref, *, chunk, a_pad):
    # x_ref : (8, BN)        rows = [x, y, z, 1, 0, 0, 0, 0], points on lanes
    # w_ref : (2*a_pad, 8)   rows [0,a_pad): imag proj + b_I; [a_pad,2a_pad): real proj + c_R
    # o_ref : (a_pad, BN)    one atom per sublane row, points on lanes
    wm = w_ref[...]                                  # loop-invariant (32x8-ish)
    n_chunks = o_ref.shape[1] // chunk

    def body(j, carry):
        s = pl.multiple_of(j * chunk, chunk)
        xc = x_ref[:, pl.ds(s, chunk)]               # (8, chunk)
        # Both phase tiles from a single MXU matmul (biases folded via ones-row).
        ph = jnp.dot(wm, xc,
                     preferred_element_type=jnp.float32,
                     precision=lax.Precision.HIGHEST)     # (2*a_pad, chunk)
        out = jnp.sin(ph[:a_pad, :]) * jnp.exp(ph[a_pad:, :])
        o_ref[:, pl.ds(s, chunk)] = out.astype(o_ref.dtype)
        return carry

    unroll = 2 if (n_chunks % 2 == 0 and n_chunks >= 2) else 1
    lax.fori_loop(0, n_chunks, body, 0, unroll=unroll)


# ----------------------------------------------------------------------------
# Host-side helpers
# ----------------------------------------------------------------------------
def quaternion_rotate(v, q):
    """Rotate rows of v (A, 3) by per-row unit quaternions q (A, 4) = (w, x, y, z)."""
    # TODO(synk): the QuaternionRotation class is not part of the spec; this is a
    # standard per-atom unit-quaternion rotation used as a stand-in.
    q = q / jnp.linalg.norm(q, axis=-1, keepdims=True)
    w, u = q[:, :1], q[:, 1:]
    uv = jnp.cross(u, v)
    return v + 2.0 * (w * uv + jnp.cross(u, uv))


@partial(jax.jit,
         static_argnames=("rref", "varpi0", "norm_const", "block_n",
                          "channels_last", "out_dtype"))
def regular_herglotz_pe(x, A_real, A_imag, w_R, b_I, b_R, quaternions=None, *,
                        rref=1.0, varpi0=1.0, norm_const=0.0,
                        block_n=16384, channels_last=True,
                        out_dtype=jnp.float32):
    """Pallas-backed RegularHerglotzPE.forward. x: (..., 3) -> (..., num_atoms)."""
    assert x.shape[-1] == 3, "input_dim must be 3 (cartesian x, y, z)"
    num_atoms = A_real.shape[0]

    # ---- fold every per-atom scalar into one (2*A_pad, 8) projection matrix ----
    if quaternions is not None:
        Ar = quaternion_rotate(A_real.astype(jnp.float32), quaternions.astype(jnp.float32))
        Ai = quaternion_rotate(A_imag.astype(jnp.float32), quaternions.astype(jnp.float32))
    else:
        Ar = A_real.astype(jnp.float32)
        Ai = A_imag.astype(jnp.float32)
    w = w_R.astype(jnp.float32) / float(varpi0)
    scale = (w / float(rref))[:, None]
    W_I = scale * Ai                                        # (A, 3)
    W_R = scale * Ar                                        # (A, 3)
    c_R = b_R.astype(jnp.float32) - w * float(norm_const)   # (A,)
    b_Ic = b_I.astype(jnp.float32)                          # (A,)

    a_pad = _round_up(max(num_atoms, 1), 8)                 # sublane-dense atoms
    wm = jnp.zeros((2 * a_pad, 8), jnp.float32)
    wm = wm.at[:num_atoms, 0:3].set(W_I).at[:num_atoms, 3].set(b_Ic)
    wm = wm.at[a_pad:a_pad + num_atoms, 0:3].set(W_R)
    wm = wm.at[a_pad:a_pad + num_atoms, 3].set(c_R)

    # ---- point layout: lane-dense x_aug (8, n_pad) = [x; y; z; 1; 0; 0; 0; 0] ----
    lead = x.shape[:-1]
    n = math.prod(lead) if lead else 1
    xf = x.reshape(n, 3).astype(jnp.float32)

    chunk = _LANE_CHUNK
    # v7x has 2 TensorCores: clamp block size to ceil(n/2) so the "parallel"
    # grid axis has at least 2 blocks on medium inputs; cap VMEM use as well.
    half = _round_up(max(1, (n + 1) // 2), chunk)
    bn = max(chunk, min(_round_up(int(block_n), chunk), half))
    max_bn = (24 * 1024 * 1024) // (2 * 4 * (8 + a_pad))    # double-buffered x + out
    bn = max(chunk, min(bn, (max_bn // chunk) * chunk))
    n_pad = _round_up(n, bn)

    x_pad = jnp.pad(xf, ((0, n_pad - n), (0, 0)))
    x_aug = jnp.concatenate(
        [x_pad.T,
         jnp.ones((1, n_pad), jnp.float32),
         jnp.zeros((4, n_pad), jnp.float32)], axis=0)       # (8, n_pad)

    out_bytes = jnp.dtype(out_dtype).itemsize
    cost = pl.CostEstimate(
        # matmul (~32 flop/elem) + sin polynomial (VALU, ~24 flop/elem) + mul
        flops=60 * a_pad * n_pad,
        transcendentals=a_pad * n_pad,                      # exp on EUP
        bytes_accessed=4 * 8 * n_pad + out_bytes * a_pad * n_pad + 4 * 16 * a_pad,
    )

    kernel = partial(_herglotz_kernel, chunk=chunk, a_pad=a_pad)
    y_t = pl.pallas_call(
        kernel,
        out_shape=jax.ShapeDtypeStruct((a_pad, n_pad), out_dtype),
        grid_spec=pltpu.PrefetchScalarGridSpec(
            num_scalar_prefetch=0,
            grid=(n_pad // bn,),
            in_specs=[
                pl.BlockSpec((8, bn), lambda i: (0, i)),
                pl.BlockSpec((2 * a_pad, 8), lambda i: (0, 0)),
            ],
            out_specs=pl.BlockSpec((a_pad, bn), lambda i: (0, i)),
        ),
        compiler_params=pltpu.CompilerParams(
            dimension_semantics=("parallel",),
            vmem_limit_bytes=32 * 1024 * 1024,
        ),
        cost_estimate=cost,
    )(x_aug, wm)

    y = y_t[:num_atoms, :n]                                 # (A, n), valid region
    if channels_last:
        # torch module contract: (..., num_atoms). Kept inside the jit so XLA
        # can fuse this transpose with the consumer's layout when composed.
        return y.T.reshape(*lead, num_atoms)
    return y.reshape((num_atoms,) + lead)


# ----------------------------------------------------------------------------
# Pure-JAX reference (mirrors the torch module) + init helper
# ----------------------------------------------------------------------------
def _reference(x, A_real, A_imag, w_R, b_I, b_R, quaternions=None, *,
               rref=1.0, varpi0=1.0, norm_const=0.0):
    if quaternions is not None:
        Ar = quaternion_rotate(A_real.astype(jnp.float32), quaternions.astype(jnp.float32))
        Ai = quaternion_rotate(A_imag.astype(jnp.float32), quaternions.astype(jnp.float32))
    else:
        Ar, Ai = A_real, A_imag
    xf = x.astype(jnp.float32)
    ax_R = jnp.einsum("...d,ad->...a", xf, Ar, precision=lax.Precision.HIGHEST) / rref
    ax_I = jnp.einsum("...d,ad->...a", xf, Ai, precision=lax.Precision.HIGHEST) / rref
    wv = w_R / varpi0
    return jnp.sin(wv * ax_I + b_I) * jnp.exp(wv * (ax_R - norm_const) + b_R)


def _generate_herglotz_vectors(key, num_atoms, dim=3):
    """JAX port of _generate_herglotz_vector, vectorized over atoms."""
    kR, kI = jax.random.split(key)
    aR = jax.random.normal(kR, (num_atoms, dim), jnp.float32)
    aR = aR / (math.sqrt(2.0) * jnp.linalg.norm(aR, axis=-1, keepdims=True))
    aI = jax.random.normal(kI, (num_atoms, dim), jnp.float32)
    aI = aI - 2.0 * jnp.sum(aI * aR, axis=-1, keepdims=True) * aR
    aI = aI / (math.sqrt(2.0) * jnp.linalg.norm(aI, axis=-1, keepdims=True))
    return aR, aI


if __name__ == "__main__":
    key = jax.random.PRNGKey(0)
    kx, ka, kw, kq = jax.random.split(key, 4)

    B, N = 2, 200
    L = 3
    num_atoms = (L + 1) ** 2          # 16

    # 3-D cartesian input points
    x = jax.random.normal(kx, (B, N, 3), dtype=jnp.float32)

    # module buffers / parameters
    A_real, A_imag = _generate_herglotz_vectors(ka, num_atoms)
    w_R = jax.random.uniform(kw, (num_atoms,), jnp.float32, -1.0 / 3.0, 1.0 / 3.0)
    b_I = jnp.zeros((num_atoms,), jnp.float32)
    b_R = jnp.zeros((num_atoms,), jnp.float32)
    quats = jax.random.normal(kq, (num_atoms, 4), jnp.float32)  # per-atom rotation

    out = regular_herglotz_pe(x, A_real, A_imag, w_R, b_I, b_R, quats,
                              rref=1.0, varpi0=1.0, norm_const=0.0)
    out = jax.block_until_ready(out)

    ref = _reference(x, A_real, A_imag, w_R, b_I, b_R, quats,
                     rref=1.0, varpi0=1.0, norm_const=0.0)

    assert out.shape == (B, N, num_atoms), out.shape
    max_err = float(jnp.max(jnp.abs(out - ref)))
    assert jnp.allclose(out, ref, atol=3e-5, rtol=3e-5), max_err

    print("KERNEL_OK")
</pallas_src>

<mosaic_0001>
module attributes {stable_mosaic.version = 11 : i64} {
  func.func @_herglotz_kernel(%arg0: i32, %arg1: memref<8x256xf32, #tpu.memory_space<vmem>>, %arg2: memref<32x8xf32, #tpu.memory_space<vmem>>, %arg3: memref<16x256xf32, #tpu.memory_space<vmem>>) attributes {dimension_semantics = [#tpu.dimension_semantics<parallel>], iteration_bounds = array<i64: 2>, scalar_prefetch = 0 : i64, scratch_operands = 0 : i64, tpu.core_type = #tpu.core_type<tc>, window_params = [{transform_indices = @transform_0, window_bounds = array<i64: 8, 256>}, {pipeline_mode = #tpu.pipeline_mode<synchronous>, transform_indices = @transform_1, window_bounds = array<i64: 32, 8>}, {transform_indices = @transform_2, window_bounds = array<i64: 16, 256>}]} {
    %c0 = arith.constant 0 : index
    %c0_0 = arith.constant 0 : index
    %0 = vector.load %arg2[%c0, %c0_0] : memref<32x8xf32, #tpu.memory_space<vmem>>, vector<32x8xf32>
    %c0_i32 = arith.constant 0 : i32
    %c256_i32 = arith.constant 256 : i32
    %1 = arith.muli %c0_i32, %c256_i32 : i32
    %2 = tpu.assume_multiple %1, 256 : i32
    %c0_1 = arith.constant 0 : index
    %3 = arith.index_cast %2 : i32 to index
    %4 = vector.load %arg1[%c0_1, %3] : memref<8x256xf32, #tpu.memory_space<vmem>>, vector<8x256xf32>
    %cst = arith.constant dense<0.000000e+00> : vector<32x256xf32>
    %5 = tpu.matmul %0, %4, %cst {dimension_numbers = #tpu.dot_dimension_numbers<[1], [0], [0], [1], [0, 0, 1, 1], [], []>, precision = #tpu.contract_precision<fp32>} : vector<32x8xf32>, vector<8x256xf32>, vector<32x256xf32> -> vector<32x256xf32>
    %6 = vector.extract_strided_slice %5 {offsets = [0, 0], sizes = [16, 256], strides = [1, 1]} : vector<32x256xf32> to vector<16x256xf32>
    %7 = math.sin %6 : vector<16x256xf32>
    %8 = vector.extract_strided_slice %5 {offsets = [16, 0], sizes = [16, 256], strides = [1, 1]} : vector<32x256xf32> to vector<16x256xf32>
    %9 = math.exp %8 : vector<16x256xf32>
    %10 = arith.mulf %7, %9 : vector<16x256xf32>
    %c0_2 = arith.constant 0 : index
    %11 = arith.index_cast %2 : i32 to index
    %12 = vector.load %arg3[%c0_2, %11] : memref<16x256xf32, #tpu.memory_space<vmem>>, vector<16x256xf32>
    tpu.vector_store %arg3[%c0_2, %11], %10 {strides = array<i32>} : memref<16x256xf32, #tpu.memory_space<vmem>>, vector<16x256xf32>,
    %c1_i32 = arith.constant 1 : i32
    return
  }
  func.func @transform_0(%arg0: i32) -> (i32, i32) {
    %c0_i32 = arith.constant 0 : i32
    %c0_i32_0 = arith.constant 0 : i32
    return %c0_i32, %arg0 : i32, i32
  }
  func.func @transform_1(%arg0: i32) -> (i32, i32) {
    %c0_i32 = arith.constant 0 : i32
    %c0_i32_0 = arith.constant 0 : i32
    %c0_i32_1 = arith.constant 0 : i32
    return %c0_i32, %c0_i32_0 : i32, i32
  }
  func.func @transform_2(%arg0: i32) -> (i32, i32) {
    %c0_i32 = arith.constant 0 : i32
    %c0_i32_0 = arith.constant 0 : i32
    return %c0_i32, %arg0 : i32, i32
  }
}

</mosaic_0001>

<llo_original>
// kernel: regular_herglotz_pe.1
$region0: #{regular_herglotz_pe.1}
  #allocation0 [shape = 'u32[]', space=smem, size = 0x4, offset = 0x4, fixed_abs, tag = 'smem constant byte address 0x4 - core index']
  #allocation1 [shape = 'u32[144,128]{1,0:T(1,128)}', space=vmem, size = 0x12000, scoped, tag = 'internal scratch']
  %s0 = inlined_call_operand.vmem [shape: f32[8,512], index: 0, kind: input, shape index: {}]
  %s1 = inlined_call_operand.vmem [shape: f32[32,8], index: 1, kind: input, shape index: {}]
  %s2 = inlined_call_operand.vmem [shape: f32[16,512], index: 2, kind: output, shape index: {}]
  %s3 = sld [smem:[#allocation0]]
  $region60: #{regular_herglotz_pe.1} parent=0
    _
  %s5 = ssub.s32 1, %s3
  %s6 = scalar_select 0, %s5, %s3
  $region1: #{regular_herglotz_pe.1} parent=0
    #allocation2 [shape = 'u8[32768]{0}', space=vmem, size = 0x8000, scoped, tag = 'output window, operand 0']
    loop: start=0, step=1, limit=4
    $region2: #{regular_herglotz_pe.1} parent=1 // loop_pre_header
      _
    $region3: #{regular_herglotz_pe.1} parent=1 // loop_header
      %s8 = sphi 0, %s12
      %p9 = scmp.ge.s32.totalorder %s8, 4
      %s18 = sphi 0, %s20
      %s21 = sphi 0, %s18
      %s22 = sphi 0, %s21
      %s38 = sphi 0, %s22
      %s42 = sphi 0, %s42
      %s44 = sphi 0, %s42
      %s45 = sphi 0, %s44
      %s59 = sphi 0, %s45
      %s65 = sphi 0, %s67
      %s68 = sphi 0, %s65
      %s69 = sphi 0, %s68
      %s85 = sphi 0, %s69
    $region4: #{regular_herglotz_pe.1} parent=1 // loop_header_branch
      %11 = sbr.rel (%p9) target = $region8
    $region5: #{regular_herglotz_pe.1} parent=1 // loop_body
      %s13 = ssub.s32 %s8, 1
      %s14 = ssub.s32 %s8, 2
      %s15 = sadd.s32 %s8, 1
      %s16 = ssub.s32 %s8, %s15
      %p17 = scmp.eq.s32.totalorder %s16, 0
      %s19 = sadd.s32 %s18, 1
      %s20 = scalar_select %p17, %s18, %s19
      %p23 = pneg %p17
      %p24 = scmp.eq.s32.totalorder %s8, 1
      %p25 = por %p23, %p24
      %p26 = scmp.ne.s32.totalorder %s18, %s21
      %p27 = scmp.eq.s32.totalorder %s8, 0
      %p28 = por %p26, %p27
      %p29 = scmp.ne.s32.totalorder %s18, %s21
      %p30 = scmp.eq.s32.totalorder %s13, 1
      %p31 = por %p29, %p30
      %p32 = scmp.ne.s32.totalorder %s21, %s22
      %p33 = scmp.eq.s32.totalorder %s13, 0
      %p34 = por %p32, %p33
      %p35 = scmp.ne.s32.totalorder %s21, %s22
      %p36 = scmp.eq.s32.totalorder %s14, 1
      %p37 = por %p35, %p36
      %p39 = scmp.ne.s32.totalorder %s22, %s38
      %p40 = scmp.eq.s32.totalorder %s14, 0
      %p41 = por %p39, %p40
      %s43 = sadd.s32 %s42, 1
      %p46 = scmp.eq.s32.totalorder %s8, 1
      %p47 = scmp.ne.s32.totalorder %s42, %s44
      %p48 = scmp.eq.s32.totalorder %s8, 0
      %p49 = por %p47, %p48
      %p50 = scmp.ne.s32.totalorder %s42, %s44
      %p51 = scmp.eq.s32.totalorder %s13, 1
      %p52 = por %p50, %p51
      %p53 = scmp.ne.s32.totalorder %s44, %s45
      %p54 = scmp.eq.s32.totalorder %s13, 0
      %p55 = por %p53, %p54
      %p56 = scmp.ne.s32.totalorder %s44, %s45
      %p57 = scmp.eq.s32.totalorder %s14, 1
      %p58 = por %p56, %p57
      %p60 = scmp.ne.s32.totalorder %s45, %s59
      %p61 = scmp.eq.s32.totalorder %s14, 0
      %p62 = por %p60, %p61
      %s63 = ssub.s32 %s8, %s15
      %p64 = scmp.eq.s32.totalorder %s63, 0
      %s66 = sadd.s32 %s65, 1
      %s67 = scalar_select %p64, %s65, %s66
      %p70 = pneg %p64
      %p71 = scmp.eq.s32.totalorder %s8, 1
      %p72 = por %p70, %p71
      %p73 = scmp.ne.s32.totalorder %s65, %s68
      %p74 = scmp.eq.s32.totalorder %s8, 0
      %p75 = por %p73, %p74
      %p76 = scmp.ne.s32.totalorder %s65, %s68
      %p77 = scmp.eq.s32.totalorder %s13, 1
      %p78 = por %p76, %p77
      %p79 = scmp.ne.s32.totalorder %s68, %s69
      %p80 = scmp.eq.s32.totalorder %s13, 0
      %p81 = por %p79, %p80
      %p82 = scmp.ne.s32.totalorder %s68, %s69
      %p83 = scmp.eq.s32.totalorder %s14, 1
      %p84 = por %p82, %p83
      %p86 = scmp.ne.s32.totalorder %s69, %s85
      %p87 = scmp.eq.s32.totalorder %s14, 0
      %p88 = por %p86, %p87
      %p89 = scmp.le.s32.totalorder 1, %s8
      %p90 = scmp.lt.s32.totalorder %s8, 3
      %p91 = pnand %p89, %p90
      %p92 = pneg %p91
      // Predicated region
      $region9: #{regular_herglotz_pe.1} parent=5 // pred_check
        _
      $region10: #{regular_herglotz_pe.1} parent=5 // pred_check_branch
        %94 = sbr.rel (%p91) target = $region12
      $region11: #{regular_herglotz_pe.1} parent=5 // pred_region
        %s95 = ssub.s32 %s8, 1
        // Predicated region
        $region13: #{regular_herglotz_pe.1} parent=11 // pred_check
          %p96 = pneg %p55
        $region14: #{regular_herglotz_pe.1} parent=11 // pred_check_branch
          %98 = sbr.rel (%p96) target = $region16
        $region15: #{regular_herglotz_pe.1} parent=11 // pred_region
          _
        $region16: #{regular_herglotz_pe.1} parent=11 // pred_fallthru
          _
      $region12: #{regular_herglotz_pe.1} parent=5 // pred_fallthru
        _
      %p99 = scmp.lt.s32.totalorder %s8, 2
      // Predicated region
      $region17: #{regular_herglotz_pe.1} parent=5 // pred_check
        %p100 = pneg %p99
      $region18: #{regular_herglotz_pe.1} parent=5 // pred_check_branch
        %102 = sbr.rel (%p100) target = $region20
      $region19: #{regular_herglotz_pe.1} parent=5 // pred_region
        // Predicated region
        $region21: #{regular_herglotz_pe.1} parent=19 // pred_check
          %p103 = pneg %p28
        $region22: #{regular_herglotz_pe.1} parent=19 // pred_check_branch
          %105 = sbr.rel (%p103) target = $region24
        $region23: #{regular_herglotz_pe.1} parent=19 // pred_region
          %s106 = smul.u32 2, %s8
          %p107 = scmp.lt.s32.totalorder %s106, 3
          %s108 = scalar_select %p107, %s106, 3
          %s109 = smul.addr %s108, 8
          %s110 = scalar_lea.vmem %s0, %s109
          %s111 = smul.u32 2, %s8
        $region24: #{regular_herglotz_pe.1} parent=19 // pred_fallthru
          _
      $region20: #{regular_herglotz_pe.1} parent=5 // pred_fallthru
        _
      %p112 = scmp.le.s32.totalorder 1, %s8
      %p113 = scmp.lt.s32.totalorder %s8, 3
      %p114 = pnand %p112, %p113
      %p115 = pneg %p114
      // Predicated region
      $region25: #{regular_herglotz_pe.1} parent=5 // pred_check
        _
      $region26: #{regular_herglotz_pe.1} parent=5 // pred_check_branch
        %117 = sbr.rel (%p114) target = $region28
      $region27: #{regular_herglotz_pe.1} parent=5 // pred_region
        %s118 = ssub.s32 %s8, 1
        %s119 = smul.u32 2, %s13
        %p120 = scmp.lt.s32.totalorder %s119, 3
        %s121 = scalar_select %p120, %s119, 3
        %s122 = smul.addr %s121, 8
        %s123 = scalar_lea.vmem %s0, %s122
        %p124 = pneg %p34
        %p125 = pneg %p31
        %p126 = pneg %p55
        %p127 = pneg %p52
        %p128 = pneg %p81
        %p129 = pneg %p78
        %s130 = sand.u32 %s68, 1
        %s131 = sand.u32 %s68, 1
        %s132 = smul.addr %s131, 32
        %s133 = scalar_lea.vmem [#allocation2], %s132
        %s134 = smul.u32 2, %s13
        %p135 = scmp.lt.s32.totalorder %s134, 3
        %s136 = scalar_select %p135, %s134, 3
        %s137 = smul.addr %s136, 8
        %s138 = scalar_lea.vmem %s0, %s137
        %s139 = smul.u32 2, %s13
        %s140 = smul.u32 2, %s13
        %v141 = vld [vmem:[%s1] sm:$0xff]
        %v142 = vld [vmem:[%s1 + $0x8] sm:$0xff]
        %v143 = vld [vmem:[%s1 + $0x10] sm:$0xff]
        %v144 = vld [vmem:[%s1 + $0x18] sm:$0xff]
        %v145 = vld [vmem:[%s138] sm:$0xff]
        %v146 = vld [vmem:[%s138 + $0x8] sm:$0xff]
        %vm147 = vcmask 64512
        %v149 = vsel %vm147, %v141, 0
        %v152 = vsel %vm147, %v142, 0
        %v155 = vsel %vm147, %v143, 0
        %v158 = vsel %vm147, %v144, 0
        %v160 = vand.u32 %v146, 4294901760
        %161 = vmatprep.subr.mxu0 %v160
        %v162 = vand.u32 %v145, 4294901760
        %163 = vmatpush1.msra.mxu0 %v162
        %164 = vmatprep.subr.mxu0 0.0
        %165 = vmatpush1.msra.mxu0 0.0
        %166 = vmatprep.subr.mxu0 0.0
        %167 = vmatpush1.msra.mxu0 0.0
        %168 = vmatprep.subr.mxu0 0.0
        %169 = vmatpush1.msra.mxu0 0.0
        %170 = vmatprep.subr.mxu0 0.0
        %171 = vmatpush1.msra.mxu0 0.0
        %172 = vmatprep.subr.mxu0 0.0
        %173 = vmatpush1.msra.mxu0 0.0
        %174 = vmatprep.subr.mxu0 0.0
        %175 = vmatpush1.msra.mxu0 0.0
        %176 = vmatprep.subr.mxu0 0.0
        %177 = vmatpush1.msra.mxu0 0.0
        %178 = vmatprep.subr.mxu0 0.0
        %179 = vmatpush1.msra.mxu0 0.0
        %180 = vmatprep.subr.mxu0 0.0
        %181 = vmatpush1.msra.mxu0 0.0
        %182 = vmatprep.subr.mxu0 0.0
        %183 = vmatpush1.msra.mxu0 0.0
        %184 = vmatprep.subr.mxu0 0.0
        %185 = vmatpush1.msra.mxu0 0.0
        %186 = vmatprep.subr.mxu0 0.0
        %187 = vmatpush1.msra.mxu0 0.0
        %188 = vmatprep.subr.mxu0 0.0
        %189 = vmatpush1.msra.mxu0 0.0
        %190 = vmatprep.subr.mxu0 0.0
        %191 = vmatpush1.msra.mxu0 0.0
        %192 = vmatprep.subr.mxu0 0.0
        %193 = vmatpush1.msra.mxu0 0.0
        %194 = vmatprep.subr.mxu0 0.0
        %195 = vmatpush1.msra.mxu0 0.0
        %196 = vmatprep.subr.mxu0 0.0
        %197 = vmatpush1.msra.mxu0 0.0
        %198 = vmatprep.subr.mxu0 0.0
        %199 = vmatpush1.msra.mxu0 0.0
        %200 = vmatprep.subr.mxu0 0.0
        %201 = vmatpush1.msra.mxu0 0.0
        %202 = vmatprep.subr.mxu0 0.0
        %203 = vmatpush1.msra.mxu0 0.0
        %204 = vmatprep.subr.mxu0 0.0
        %205 = vmatpush1.msra.mxu0 0.0
        %206 = vmatprep.subr.mxu0 0.0
        %207 = vmatpush1.msra.mxu0 0.0
        %208 = vmatprep.subr.mxu0 0.0
        %209 = vmatpush1.msra.mxu0 0.0
        %210 = vmatprep.subr.mxu0 0.0
        %211 = vmatpush1.msra.mxu0 0.0
        %212 = vmatprep.subr.mxu0 0.0
        %213 = vmatpush1.msra.mxu0 0.0
        %214 = vmatprep.subr.mxu0 0.0
        %215 = vmatpush1.msra.mxu0 0.0
        %216 = vmatprep.subr.mxu0 0.0
        %217 = vmatpush1.msra.mxu0 0.0
        %218 = vmatprep.subr.mxu0 0.0
        %219 = vmatpush1.msra.mxu0 0.0
        %220 = vmatprep.subr.mxu0 0.0
        %221 = vmatpush1.msra.mxu0 0.0
        %222 = vmatprep.subr.mxu0 0.0
        %223 = vmatpush1.msra.mxu0 0.0
        %224 = vmatprep.subr.mxu0 0.0
        %225 = vmatpush1.msra.mxu0 0.0
        %226 = vmatprep.mubr.f32.mxu0 0.0
        %v227 = vand.u32 %v149, 4294901760
        %v228 = vsub.f32 %v149, %v227
        %v229 = vand.u32 %v228, 4294901760
        %v230 = vsub.f32 %v228, %v229
        %v231 = vand.u32 %v230, 4294901760
        %232 = vmatmul.mubr.f32.gmra.mrb[0].mxu0 %v231
        %v233 = vpop.f32.mrb[0].mxu0
        %v234 = vadd.f32 0.0, %v233
        %v235 = vpop.f32.mrb[0].mxu0
        %v236 = vadd.f32 0.0, %v235
        %237 = vmatprep.mubr.f32.mxu0 0.0
        %v238 = vand.u32 %v152, 4294901760
        %v239 = vsub.f32 %v152, %v238
        %v240 = vand.u32 %v239, 4294901760
        %v241 = vsub.f32 %v239, %v240
        %v242 = vand.u32 %v241, 4294901760
        %243 = vmatmul.mubr.f32.gmra.mrb[0].mxu0 %v242
        %v244 = vpop.f32.mrb[0].mxu0
        %v245 = vadd.f32 0.0, %v244
        %v246 = vpop.f32.mrb[0].mxu0
        %v247 = vadd.f32 0.0, %v246
        %248 = vmatprep.mubr.f32.mxu0 0.0
        %v249 = vand.u32 %v155, 4294901760
        %v250 = vsub.f32 %v155, %v249
        %v251 = vand.u32 %v250, 4294901760
        %v252 = vsub.f32 %v250, %v251
        %v253 = vand.u32 %v252, 4294901760
        %254 = vmatmul.mubr.f32.gmra.mrb[0].mxu0 %v253
        %v255 = vpop.f32.mrb[0].mxu0
        %v256 = vadd.f32 0.0, %v255
        %v257 = vpop.f32.mrb[0].mxu0
        %v258 = vadd.f32 0.0, %v257
        %259 = vmatprep.mubr.f32.mxu0 0.0
        %v260 = vand.u32 %v158, 4294901760
        %v261 = vsub.f32 %v158, %v260
        %v262 = vand.u32 %v261, 4294901760
        %v263 = vsub.f32 %v261, %v262
        %v264 = vand.u32 %v263, 4294901760
        %265 = vmatmul.mubr.f32.gmra.mrb[0].mxu0 %v264
        %v266 = vpop.f32.mrb[0].mxu0
        %v267 = vadd.f32 0.0, %v266
        %v268 = vpop.f32.mrb[0].mxu0
        %v269 = vadd.f32 0.0, %v268
        %270 = vdwg.mxu0
        %v271 = vand.u32 %v146, 4294901760
        %v272 = vsub.f32 %v146, %v271
        %v273 = vand.u32 %v272, 4294901760
        %v274 = vsub.f32 %v272, %v273
        %v275 = vand.u32 %v274, 4294901760
        %276 = vmatprep.subr.mxu0 %v275
        %v277 = vand.u32 %v145, 4294901760
        %v278 = vsub.f32 %v145, %v277
        %v279 = vand.u32 %v278, 4294901760
        %v280 = vsub.f32 %v278, %v279
        %v281 = vand.u32 %v280, 4294901760
        %282 = vmatpush1.msra.mxu0 %v281
        %283 = vmatprep.subr.mxu0 0.0
        %284 = vmatpush1.msra.mxu0 0.0
        %285 = vmatprep.subr.mxu0 0.0
        %286 = vmatpush1.msra.mxu0 0.0
        %287 = vmatprep.subr.mxu0 0.0
        %288 = vmatpush1.msra.mxu0 0.0
        %289 = vmatprep.subr.mxu0 0.0
        %290 = vmatpush1.msra.mxu0 0.0
        %291 = vmatprep.subr.mxu0 0.0
        %292 = vmatpush1.msra.mxu0 0.0
        %293 = vmatprep.subr.mxu0 0.0
        %294 = vmatpush1.msra.mxu0 0.0
        %295 = vmatprep.subr.mxu0 0.0
        %296 = vmatpush1.msra.mxu0 0.0
        %297 = vmatprep.subr.mxu0 0.0
        %298 = vmatpush1.msra.mxu0 0.0
        %299 = vmatprep.subr.mxu0 0.0
        %300 = vmatpush1.msra.mxu0 0.0
        %301 = vmatprep.subr.mxu0 0.0
        %302 = vmatpush1.msra.mxu0 0.0
        %303 = vmatprep.subr.mxu0 0.0
        %304 = vmatpush1.msra.mxu0 0.0
        %305 = vmatprep.subr.mxu0 0.0
        %306 = vmatpush1.msra.mxu0 0.0
        %307 = vmatprep.subr.mxu0 0.0
        %308 = vmatpush1.msra.mxu0 0.0
        %309 = vmatprep.subr.mxu0 0.0
        %310 = vmatpush1.msra.mxu0 0.0
        %311 = vmatprep.subr.mxu0 0.0
        %312 = vmatpush1.msra.mxu0 0.0
        %313 = vmatprep.subr.mxu0 0.0
        %314 = vmatpush1.msra.mxu0 0.0
        %315 = vmatprep.subr.mxu0 0.0
        %316 = vmatpush1.msra.mxu0 0.0
        %317 = vmatprep.subr.mxu0 0.0
        %318 = vmatpush1.msra.mxu0 0.0
        %319 = vmatprep.subr.mxu0 0.0
        %320 = vmatpush1.msra.mxu0 0.0
        %321 = vmatprep.subr.mxu0 0.0
        %322 = vmatpush1.msra.mxu0 0.0
        %323 = vmatprep.subr.mxu0 0.0
        %324 = vmatpush1.msra.mxu0 0.0
        %325 = vmatprep.subr.mxu0 0.0
        %326 = vmatpush1.msra.mxu0 0.0
        %327 = vmatprep.subr.mxu0 0.0
        %328 = vmatpush1.msra.mxu0 0.0
        %329 = vmatprep.subr.mxu0 0.0
        %330 = vmatpush1.msra.mxu0 0.0
        %331 = vmatprep.subr.mxu0 0.0
        %332 = vmatpush1.msra.mxu0 0.0
        %333 = vmatprep.subr.mxu0 0.0
        %334 = vmatpush1.msra.mxu0 0.0
        %335 = vmatprep.subr.mxu0 0.0
        %336 = vmatpush1.msra.mxu0 0.0
        %337 = vmatprep.subr.mxu0 0.0
        %338 = vmatpush1.msra.mxu0 0.0
        %339 = vmatprep.subr.mxu0 0.0
        %340 = vmatpush1.msra.mxu0 0.0
        %341 = vmatprep.subr.mxu0 0.0
        %342 = vmatpush1.msra.mxu0 0.0
        %343 = vmatprep.subr.mxu0 0.0
        %344 = vmatpush1.msra.mxu0 0.0
        %345 = vmatprep.mubr.f32.mxu0 0.0
        %v346 = vand.u32 %v149, 4294901760
        %347 = vmatmul.mubr.f32.gmra.mrb[0].mxu0 %v346
        %v348 = vpop.f32.mrb[0].mxu0
        %v349 = vadd.f32 %v234, %v348
        %v350 = vpop.f32.mrb[0].mxu0
        %v351 = vadd.f32 %v236, %v350
        %352 = vmatprep.mubr.f32.mxu0 0.0
        %v353 = vand.u32 %v152, 4294901760
        %354 = vmatmul.mubr.f32.gmra.mrb[0].mxu0 %v353
        %v355 = vpop.f32.mrb[0].mxu0
        %v356 = vadd.f32 %v245, %v355
        %v357 = vpop.f32.mrb[0].mxu0
        %v358 = vadd.f32 %v247, %v357
        %359 = vmatprep.mubr.f32.mxu0 0.0
        %v360 = vand.u32 %v155, 4294901760
        %361 = vmatmul.mubr.f32.gmra.mrb[0].mxu0 %v360
        %v362 = vpop.f32.mrb[0].mxu0
        %v363 = vadd.f32 %v256, %v362
        %v364 = vpop.f32.mrb[0].mxu0
        %v365 = vadd.f32 %v258, %v364
        %366 = vmatprep.mubr.f32.mxu0 0.0
        %v367 = vand.u32 %v158, 4294901760
        %368 = vmatmul.mubr.f32.gmra.mrb[0].mxu0 %v367
        %v369 = vpop.f32.mrb[0].mxu0
        %v370 = vadd.f32 %v267, %v369
        %v371 = vpop.f32.mrb[0].mxu0
        %v372 = vadd.f32 %v269, %v371
        %373 = vdwg.mxu0
        %v374 = vand.u32 %v146, 4294901760
        %v375 = vsub.f32 %v146, %v374
        %376 = vmatprep.subr.mxu0 %v375
        %v377 = vand.u32 %v145, 4294901760
        %v378 = vsub.f32 %v145, %v377
        %379 = vmatpush1.msra.mxu0 %v378
        %380 = vmatprep.subr.mxu0 0.0
        %381 = vmatpush1.msra.mxu0 0.0
        %382 = vmatprep.subr.mxu0 0.0
        %383 = vmatpush1.msra.mxu0 0.0
        %384 = vmatprep.subr.mxu0 0.0
        %385 = vmatpush1.msra.mxu0 0.0
        %386 = vmatprep.subr.mxu0 0.0
        %387 = vmatpush1.msra.mxu0 0.0
        %388 = vmatprep.subr.mxu0 0.0
        %389 = vmatpush1.msra.mxu0 0.0
        %390 = vmatprep.subr.mxu0 0.0
        %391 = vmatpush1.msra.mxu0 0.0
        %392 = vmatprep.subr.mxu0 0.0
        %393 = vmatpush1.msra.mxu0 0.0
        %394 = vmatprep.subr.mxu0 0.0
        %395 = vmatpush1.msra.mxu0 0.0
        %396 = vmatprep.subr.mxu0 0.0
        %397 = vmatpush1.msra.mxu0 0.0
        %398 = vmatprep.subr.mxu0 0.0
        %399 = vmatpush1.msra.mxu0 0.0
        %400 = vmatprep.subr.mxu0 0.0
        %401 = vmatpush1.msra.mxu0 0.0
        %402 = vmatprep.subr.mxu0 0.0
        %403 = vmatpush1.msra.mxu0 0.0
        %404 = vmatprep.subr.mxu0 0.0
        %405 = vmatpush1.msra.mxu0 0.0
        %406 = vmatprep.subr.mxu0 0.0
        %407 = vmatpush1.msra.mxu0 0.0
        %408 = vmatprep.subr.mxu0 0.0
        %409 = vmatpush1.msra.mxu0 0.0
        %410 = vmatprep.subr.mxu0 0.0
        %411 = vmatpush1.msra.mxu0 0.0
        %412 = vmatprep.subr.mxu0 0.0
        %413 = vmatpush1.msra.mxu0 0.0
        %414 = vmatprep.subr.mxu0 0.0
        %415 = vmatpush1.msra.mxu0 0.0
        %416 = vmatprep.subr.mxu0 0.0
        %417 = vmatpush1.msra.mxu0 0.0
        %418 = vmatprep.subr.mxu0 0.0
        %419 = vmatpush1.msra.mxu0 0.0
        %420 = vmatprep.subr.mxu0 0.0
        %421 = vmatpush1.msra.mxu0 0.0
        %422 = vmatprep.subr.mxu0 0.0
        %423 = vmatpush1.msra.mxu0 0.0
        %424 = vmatprep.subr.mxu0 0.0
        %425 = vmatpush1.msra.mxu0 0.0
        %426 = vmatprep.subr.mxu0 0.0
        %427 = vmatpush1.msra.mxu0 0.0
        %428 = vmatprep.subr.mxu0 0.0
        %429 = vmatpush1.msra.mxu0 0.0
        %430 = vmatprep.subr.mxu0 0.0
        %431 = vmatpush1.msra.mxu0 0.0
        %432 = vmatprep.subr.mxu0 0.0
        %433 = vmatpush1.msra.mxu0 0.0
        %434 = vmatprep.subr.mxu0 0.0
        %435 = vmatpush1.msra.mxu0 0.0
        %436 = vmatprep.subr.mxu0 0.0
        %437 = vmatpush1.msra.mxu0 0.0
        %438 = vmatprep.subr.mxu0 0.0
        %439 = vmatpush1.msra.mxu0 0.0
        %440 = vmatprep.subr.mxu0 0.0
        %441 = vmatpush1.msra.mxu0 0.0
        %442 = vmatprep.mubr.f32.mxu0 0.0
        %v443 = vand.u32 %v149, 4294901760
        %v444 = vsub.f32 %v149, %v443
        %445 = vmatmul.mubr.f32.gmra.mrb[0].mxu0 %v444
        %v446 = vpop.f32.mrb[0].mxu0
        %v447 = vadd.f32 %v349, %v446
        %v448 = vpop.f32.mrb[0].mxu0
        %v449 = vadd.f32 %v351, %v448
        %450 = vmatprep.mubr.f32.mxu0 0.0
        %v451 = vand.u32 %v152, 4294901760
        %v452 = vsub.f32 %v152, %v451
        %453 = vmatmul.mubr.f32.gmra.mrb[0].mxu0 %v452
        %v454 = vpop.f32.mrb[0].mxu0
        %v455 = vadd.f32 %v356, %v454
        %v456 = vpop.f32.mrb[0].mxu0
        %v457 = vadd.f32 %v358, %v456
        %458 = vmatprep.mubr.f32.mxu0 0.0
        %v459 = vand.u32 %v155, 4294901760
        %v460 = vsub.f32 %v155, %v459
        %461 = vmatmul.mubr.f32.gmra.mrb[0].mxu0 %v460
        %v462 = vpop.f32.mrb[0].mxu0
        %v463 = vadd.f32 %v363, %v462
        %v464 = vpop.f32.mrb[0].mxu0
        %v465 = vadd.f32 %v365, %v464
        %466 = vmatprep.mubr.f32.mxu0 0.0
        %v467 = vand.u32 %v158, 4294901760
        %v468 = vsub.f32 %v158, %v467
        %469 = vmatmul.mubr.f32.gmra.mrb[0].mxu0 %v468
        %v470 = vpop.f32.mrb[0].mxu0
        %v471 = vadd.f32 %v370, %v470
        %v472 = vpop.f32.mrb[0].mxu0
        %v473 = vadd.f32 %v372, %v472
        %474 = vdwg.mxu0
        %v475 = vand.u32 %v146, 4294901760
        %476 = vmatprep.subr.mxu0 %v475
        %v477 = vand.u32 %v145, 4294901760
        %478 = vmatpush1.msra.mxu0 %v477
        %479 = vmatprep.subr.mxu0 0.0
        %480 = vmatpush1.msra.mxu0 0.0
        %481 = vmatprep.subr.mxu0 0.0
        %482 = vmatpush1.msra.mxu0 0.0
        %483 = vmatprep.subr.mxu0 0.0
        %484 = vmatpush1.msra.mxu0 0.0
        %485 = vmatprep.subr.mxu0 0.0
        %486 = vmatpush1.msra.mxu0 0.0
        %487 = vmatprep.subr.mxu0 0.0
        %488 = vmatpush1.msra.mxu0 0.0
        %489 = vmatprep.subr.mxu0 0.0
        %490 = vmatpush1.msra.mxu0 0.0
        %491 = vmatprep.subr.mxu0 0.0
        %492 = vmatpush1.msra.mxu0 0.0
        %493 = vmatprep.subr.mxu0 0.0
        %494 = vmatpush1.msra.mxu0 0.0
        %495 = vmatprep.subr.mxu0 0.0
        %496 = vmatpush1.msra.mxu0 0.0
        %497 = vmatprep.subr.mxu0 0.0
        %498 = vmatpush1.msra.mxu0 0.0
        %499 = vmatprep.subr.mxu0 0.0
        %500 = vmatpush1.msra.mxu0 0.0
        %501 = vmatprep.subr.mxu0 0.0
        %502 = vmatpush1.msra.mxu0 0.0
        %503 = vmatprep.subr.mxu0 0.0
        %504 = vmatpush1.msra.mxu0 0.0
        %505 = vmatprep.subr.mxu0 0.0
        %506 = vmatpush1.msra.mxu0 0.0
        %507 = vmatprep.subr.mxu0 0.0
        %508 = vmatpush1.msra.mxu0 0.0
        %509 = vmatprep.subr.mxu0 0.0
        %510 = vmatpush1.msra.mxu0 0.0
        %511 = vmatprep.subr.mxu0 0.0
        %512 = vmatpush1.msra.mxu0 0.0
        %513 = vmatprep.subr.mxu0 0.0
        %514 = vmatpush1.msra.mxu0 0.0
        %515 = vmatprep.subr.mxu0 0.0
        %516 = vmatpush1.msra.mxu0 0.0
        %517 = vmatprep.subr.mxu0 0.0
        %518 = vmatpush1.msra.mxu0 0.0
        %519 = vmatprep.subr.mxu0 0.0
        %520 = vmatpush1.msra.mxu0 0.0
        %521 = vmatprep.subr.mxu0 0.0
        %522 = vmatpush1.msra.mxu0 0.0
        %523 = vmatprep.subr.mxu0 0.0
        %524 = vmatpush1.msra.mxu0 0.0
        %525 = vmatprep.subr.mxu0 0.0
        %526 = vmatpush1.msra.mxu0 0.0
        %527 = vmatprep.subr.mxu0 0.0
        %528 = vmatpush1.msra.mxu0 0.0
        %529 = vmatprep.subr.mxu0 0.0
        %530 = vmatpush1.msra.mxu0 0.0
        %531 = vmatprep.subr.mxu0 0.0
        %532 = vmatpush1.msra.mxu0 0.0
        %533 = vmatprep.subr.mxu0 0.0
        %534 = vmatpush1.msra.mxu0 0.0
        %535 = vmatprep.subr.mxu0 0.0
        %536 = vmatpush1.msra.mxu0 0.0
        %537 = vmatprep.subr.mxu0 0.0
        %538 = vmatpush1.msra.mxu0 0.0
        %539 = vmatprep.subr.mxu0 0.0
        %540 = vmatpush1.msra.mxu0 0.0
        %541 = vmatprep.mubr.f32.mxu0 0.0
        %v542 = vand.u32 %v149, 4294901760
        %v543 = vsub.f32 %v149, %v542
        %v544 = vand.u32 %v543, 4294901760
        %545 = vmatmul.mubr.f32.gmra.mrb[0].mxu0 %v544
        %v546 = vpop.f32.mrb[0].mxu0
        %v547 = vadd.f32 %v447, %v546
        %v548 = vpop.f32.mrb[0].mxu0
        %v549 = vadd.f32 %v449, %v548
        %550 = vmatprep.mubr.f32.mxu0 0.0
        %v551 = vand.u32 %v152, 4294901760
        %v552 = vsub.f32 %v152, %v551
        %v553 = vand.u32 %v552, 4294901760
        %554 = vmatmul.mubr.f32.gmra.mrb[0].mxu0 %v553
        %v555 = vpop.f32.mrb[0].mxu0
        %v556 = vadd.f32 %v455, %v555
        %v557 = vpop.f32.mrb[0].mxu0
        %v558 = vadd.f32 %v457, %v557
        %559 = vmatprep.mubr.f32.mxu0 0.0
        %v560 = vand.u32 %v155, 4294901760
        %v561 = vsub.f32 %v155, %v560
        %v562 = vand.u32 %v561, 4294901760
        %563 = vmatmul.mubr.f32.gmra.mrb[0].mxu0 %v562
        %v564 = vpop.f32.mrb[0].mxu0
        %v565 = vadd.f32 %v463, %v564
        %v566 = vpop.f32.mrb[0].mxu0
        %v567 = vadd.f32 %v465, %v566
        %568 = vmatprep.mubr.f32.mxu0 0.0
        %v569 = vand.u32 %v158, 4294901760
        %v570 = vsub.f32 %v158, %v569
        %v571 = vand.u32 %v570, 4294901760
        %572 = vmatmul.mubr.f32.gmra.mrb[0].mxu0 %v571
        %v573 = vpop.f32.mrb[0].mxu0
        %v574 = vadd.f32 %v471, %v573
        %v575 = vpop.f32.mrb[0].mxu0
        %v576 = vadd.f32 %v473, %v575
        %577 = vdwg.mxu0
        %v578 = vand.u32 %v146, 4294901760
        %v579 = vsub.f32 %v146, %v578
        %v580 = vand.u32 %v579, 4294901760
        %581 = vmatprep.subr.mxu0 %v580
        %v582 = vand.u32 %v145, 4294901760
        %v583 = vsub.f32 %v145, %v582
        %v584 = vand.u32 %v583, 4294901760
        %585 = vmatpush1.msra.mxu0 %v584
        %586 = vmatprep.subr.mxu0 0.0
        %587 = vmatpush1.msra.mxu0 0.0
        %588 = vmatprep.subr.mxu0 0.0
        %589 = vmatpush1.msra.mxu0 0.0
        %590 = vmatprep.subr.mxu0 0.0
        %591 = vmatpush1.msra.mxu0 0.0
        %592 = vmatprep.subr.mxu0 0.0
        %593 = vmatpush1.msra.mxu0 0.0
        %594 = vmatprep.subr.mxu0 0.0
        %595 = vmatpush1.msra.mxu0 0.0
        %596 = vmatprep.subr.mxu0 0.0
        %597 = vmatpush1.msra.mxu0 0.0
        %598 = vmatprep.subr.mxu0 0.0
        %599 = vmatpush1.msra.mxu0 0.0
        %600 = vmatprep.subr.mxu0 0.0
        %601 = vmatpush1.msra.mxu0 0.0
        %602 = vmatprep.subr.mxu0 0.0
        %603 = vmatpush1.msra.mxu0 0.0
        %604 = vmatprep.subr.mxu0 0.0
        %605 = vmatpush1.msra.mxu0 0.0
        %606 = vmatprep.subr.mxu0 0.0
        %607 = vmatpush1.msra.mxu0 0.0
        %608 = vmatprep.subr.mxu0 0.0
        %609 = vmatpush1.msra.mxu0 0.0
        %610 = vmatprep.subr.mxu0 0.0
        %611 = vmatpush1.msra.mxu0 0.0
        %612 = vmatprep.subr.mxu0 0.0
        %613 = vmatpush1.msra.mxu0 0.0
        %614 = vmatprep.subr.mxu0 0.0
        %615 = vmatpush1.msra.mxu0 0.0
        %616 = vmatprep.subr.mxu0 0.0
        %617 = vmatpush1.msra.mxu0 0.0
        %618 = vmatprep.subr.mxu0 0.0
        %619 = vmatpush1.msra.mxu0 0.0
        %620 = vmatprep.subr.mxu0 0.0
        %621 = vmatpush1.msra.mxu0 0.0
        %622 = vmatprep.subr.mxu0 0.0
        %623 = vmatpush1.msra.mxu0 0.0
        %624 = vmatprep.subr.mxu0 0.0
        %625 = vmatpush1.msra.mxu0 0.0
        %626 = vmatprep.subr.mxu0 0.0
        %627 = vmatpush1.msra.mxu0 0.0
        %628 = vmatprep.subr.mxu0 0.0
        %629 = vmatpush1.msra.mxu0 0.0
        %630 = vmatprep.subr.mxu0 0.0
        %631 = vmatpush1.msra.mxu0 0.0
        %632 = vmatprep.subr.mxu0 0.0
        %633 = vmatpush1.msra.mxu0 0.0
        %634 = vmatprep.subr.mxu0 0.0
        %635 = vmatpush1.msra.mxu0 0.0
        %636 = vmatprep.subr.mxu0 0.0
        %637 = vmatpush1.msra.mxu0 0.0
        %638 = vmatprep.subr.mxu0 0.0
        %639 = vmatpush1.msra.mxu0 0.0
        %640 = vmatprep.subr.mxu0 0.0
        %641 = vmatpush1.msra.mxu0 0.0
        %642 = vmatprep.subr.mxu0 0.0
        %643 = vmatpush1.msra.mxu0 0.0
        %644 = vmatprep.subr.mxu0 0.0
        %645 = vmatpush1.msra.mxu0 0.0
        %646 = vmatprep.subr.mxu0 0.0
        %647 = vmatpush1.msra.mxu0 0.0
        %648 = vmatprep.mubr.f32.mxu0 0.0
        %v649 = vand.u32 %v149, 4294901760
        %650 = vmatmul.mubr.f32.gmra.mrb[0].mxu0 %v649
        %v651 = vpop.f32.mrb[0].mxu0
        %v652 = vadd.f32 %v547, %v651
        %v653 = vpop.f32.mrb[0].mxu0
        %v654 = vadd.f32 %v549, %v653
        %655 = vmatprep.mubr.f32.mxu0 0.0
        %v656 = vand.u32 %v152, 4294901760
        %657 = vmatmul.mubr.f32.gmra.mrb[0].mxu0 %v656
        %v658 = vpop.f32.mrb[0].mxu0
        %v659 = vadd.f32 %v556, %v658
        %v660 = vpop.f32.mrb[0].mxu0
        %v661 = vadd.f32 %v558, %v660
        %662 = vmatprep.mubr.f32.mxu0 0.0
        %v663 = vand.u32 %v155, 4294901760
        %664 = vmatmul.mubr.f32.gmra.mrb[0].mxu0 %v663
        %v665 = vpop.f32.mrb[0].mxu0
        %v666 = vadd.f32 %v565, %v665
        %v667 = vpop.f32.mrb[0].mxu0
        %v668 = vadd.f32 %v567, %v667
        %669 = vmatprep.mubr.f32.mxu0 0.0
        %v670 = vand.u32 %v158, 4294901760
        %671 = vmatmul.mubr.f32.gmra.mrb[0].mxu0 %v670
        %v672 = vpop.f32.mrb[0].mxu0
        %v673 = vadd.f32 %v574, %v672
        %v674 = vpop.f32.mrb[0].mxu0
        %v675 = vadd.f32 %v576, %v674
        %676 = vdwg.mxu0
        %v677 = vand.u32 %v146, 4294901760
        %678 = vmatprep.subr.mxu0 %v677
        %v679 = vand.u32 %v145, 4294901760
        %680 = vmatpush1.msra.mxu0 %v679
        %681 = vmatprep.subr.mxu0 0.0
        %682 = vmatpush1.msra.mxu0 0.0
        %683 = vmatprep.subr.mxu0 0.0
        %684 = vmatpush1.msra.mxu0 0.0
        %685 = vmatprep.subr.mxu0 0.0
        %686 = vmatpush1.msra.mxu0 0.0
        %687 = vmatprep.subr.mxu0 0.0
        %688 = vmatpush1.msra.mxu0 0.0
        %689 = vmatprep.subr.mxu0 0.0
        %690 = vmatpush1.msra.mxu0 0.0
        %691 = vmatprep.subr.mxu0 0.0
        %692 = vmatpush1.msra.mxu0 0.0
        %693 = vmatprep.subr.mxu0 0.0
        %694 = vmatpush1.msra.mxu0 0.0
        %695 = vmatprep.subr.mxu0 0.0
        %696 = vmatpush1.msra.mxu0 0.0
        %697 = vmatprep.subr.mxu0 0.0
        %698 = vmatpush1.msra.mxu0 0.0
        %699 = vmatprep.subr.mxu0 0.0
        %700 = vmatpush1.msra.mxu0 0.0
        %701 = vmatprep.subr.mxu0 0.0
        %702 = vmatpush1.msra.mxu0 0.0
        %703 = vmatprep.subr.mxu0 0.0
        %704 = vmatpush1.msra.mxu0 0.0
        %705 = vmatprep.subr.mxu0 0.0
        %706 = vmatpush1.msra.mxu0 0.0
        %707 = vmatprep.subr.mxu0 0.0
        %708 = vmatpush1.msra.mxu0 0.0
        %709 = vmatprep.subr.mxu0 0.0
        %710 = vmatpush1.msra.mxu0 0.0
        %711 = vmatprep.subr.mxu0 0.0
        %712 = vmatpush1.msra.mxu0 0.0
        %713 = vmatprep.subr.mxu0 0.0
        %714 = vmatpush1.msra.mxu0 0.0
        %715 = vmatprep.subr.mxu0 0.0
        %716 = vmatpush1.msra.mxu0 0.0
        %717 = vmatprep.subr.mxu0 0.0
        %718 = vmatpush1.msra.mxu0 0.0
        %719 = vmatprep.subr.mxu0 0.0
        %720 = vmatpush1.msra.mxu0 0.0
        %721 = vmatprep.subr.mxu0 0.0
        %722 = vmatpush1.msra.mxu0 0.0
        %723 = vmatprep.subr.mxu0 0.0
        %724 = vmatpush1.msra.mxu0 0.0
        %725 = vmatprep.subr.mxu0 0.0
        %726 = vmatpush1.msra.mxu0 0.0
        %727 = vmatprep.subr.mxu0 0.0
        %728 = vmatpush1.msra.mxu0 0.0
        %729 = vmatprep.subr.mxu0 0.0
        %730 = vmatpush1.msra.mxu0 0.0
        %731 = vmatprep.subr.mxu0 0.0
        %732 = vmatpush1.msra.mxu0 0.0
        %733 = vmatprep.subr.mxu0 0.0
        %734 = vmatpush1.msra.mxu0 0.0
        %735 = vmatprep.subr.mxu0 0.0
        %736 = vmatpush1.msra.mxu0 0.0
        %737 = vmatprep.subr.mxu0 0.0
        %738 = vmatpush1.msra.mxu0 0.0
        %739 = vmatprep.subr.mxu0 0.0
        %740 = vmatpush1.msra.mxu0 0.0
        %741 = vmatprep.subr.mxu0 0.0
        %742 = vmatpush1.msra.mxu0 0.0
        %743 = vmatprep.mubr.f32.mxu0 0.0
        %v744 = vand.u32 %v149, 4294901760
        %745 = vmatmul.mubr.f32.gmra.mrb[0].mxu0 %v744
        %v746 = vpop.f32.mrb[0].mxu0
        %v747 = vadd.f32 %v652, %v746
        %v748 = vpop.f32.mrb[0].mxu0
        %v749 = vadd.f32 %v654, %v748
        %750 = vmatprep.mubr.f32.mxu0 0.0
        %v751 = vand.u32 %v152, 4294901760
        %752 = vmatmul.mubr.f32.gmra.mrb[0].mxu0 %v751
        %v753 = vpop.f32.mrb[0].mxu0
        %v754 = vadd.f32 %v659, %v753
        %v755 = vpop.f32.mrb[0].mxu0
        %v756 = vadd.f32 %v661, %v755
        %757 = vmatprep.mubr.f32.mxu0 0.0
        %v758 = vand.u32 %v155, 4294901760
        %759 = vmatmul.mubr.f32.gmra.mrb[0].mxu0 %v758
        %v760 = vpop.f32.mrb[0].mxu0
        %v761 = vadd.f32 %v666, %v760
        %v762 = vpop.f32.mrb[0].mxu0
        %v763 = vadd.f32 %v668, %v762
        %764 = vmatprep.mubr.f32.mxu0 0.0
        %v765 = vand.u32 %v158, 4294901760
        %766 = vmatmul.mubr.f32.gmra.mrb[0].mxu0 %v765
        %v767 = vpop.f32.mrb[0].mxu0
        %v768 = vadd.f32 %v673, %v767
        %v769 = vpop.f32.mrb[0].mxu0
        %v770 = vadd.f32 %v675, %v769
        %771 = vdwg.mxu0
        %v772 = vand.u32 2147483647, %v747
        %vm773 = vcmp.le.f32.partialorder %v772, 0.7853982
        %vm774 = vcmp.lt.s32.totalorder %v747, 0
        %v775 = vand.u32 %v747, 2139095040
        %v776 = vshrl.u32 %v775, 23
        %v777 = vsub.s32 %v776, 127
        %v778 = vand.u32 2147483647, %v747
        %v779 = vand.u32 %v778, 8388607
        %v780 = vor.u32 %v779, 8388608
        %v781 = vsub.s32 0, %v780
        %v782 = vadd.s32 %v777, 1
        %vm783 = vcmp.gt.s32.totalorder %v782, 0
        %v784 = vsel %vm783, %v782, 0
        %v785 = vshrl.u32 %v784, 5
        %v786 = vand.u32 %v784, 31
        %v787 = vsub.s32 32, %v786
        %v788 = vshrl.u32 683565275, %v787
        %v789 = vshll.u32 683565275, %v786
        %v790 = vshrl.u32 2475754826, %v787
        %v791 = vor.u32 %v789, %v790
        %v792 = vshll.u32 2475754826, %v786
        %v793 = vshrl.u32 2131351028, %v787
        %v794 = vor.u32 %v792, %v793
        %v795 = vshll.u32 2131351028, %v786
        %v796 = vshrl.u32 2102212464, %v787
        %v797 = vor.u32 %v795, %v796
        %v798 = vshll.u32 2102212464, %v786
        %v799 = vshrl.u32 920167782, %v787
        %v800 = vor.u32 %v798, %v799
        %v801 = vshll.u32 920167782, %v786
        %v802 = vshrl.u32 1326507024, %v787
        %v803 = vor.u32 %v801, %v802
        %vm804 = vcmp.lt.s32.totalorder %v785, 1
        %vm805 = vcmp.lt.s32.totalorder %v785, 2
        %vm806 = vcmp.lt.s32.totalorder %v785, 3
        %vm807 = vcmp.lt.s32.totalorder %v785, 4
        %v808 = vsel %vm804, %v788, %v791
        %v809 = vsel %vm807, %v797, 2102212464
        %v810 = vsel %vm806, %v794, %v809
        %v811 = vsel %vm805, %v808, %v810
        %v812 = vsel %vm804, %v791, %v794
        %v813 = vsel %vm807, %v800, 920167782
        %v814 = vsel %vm806, %v797, %v813
        %v815 = vsel %vm805, %v812, %v814
        %v816 = vsel %vm804, %v794, %v797
        %v817 = vsel %vm807, %v803, 1326507024
        %v818 = vsel %vm806, %v800, %v817
        %v819 = vsel %vm805, %v816, %v818
        %v820 = vshll.u32 %v780, 8
        %v821 = vmul.u32.u64.compose %v820, %v819
        %v822 = vextract.low.u32 %v821
        %v823 = vextract.high.u32 %v821
        %v824 = vmul.u32.u64.compose %v820, %v815
        %v825 = vextract.low.u32 %v824
        %v826 = vextract.high.u32 %v824
        %v827 = vmul.u32 %v820, %v811
        %v828 = vadd.s32 %v823, %v825
        %vm829 = vc.u32 %v823, %v825
        %v830 = vadd.s32 %v826, 1
        %v831 = vsel %vm829, %v830, %v826
        %v832 = vadd.s32 %v827, %v831
        %v833 = vadd.s32 %v832, 536870912
        %v834 = vshrl.u32 %v833, 30
        %v835 = vshll.u32 %v834, 30
        %v836 = vsub.s32 %v832, %v835
        %vm837 = vcmp.lt.s32.totalorder %v836, 0
        %v838 = vsub.s32 0, %v836
        %v839 = vsel %vm837, %v838, %v836
        %v840 = vclz %v839
        %v841 = vsub.s32 %v840, 2
        %vm842 = vcmp.gt.s32.totalorder 0, %v841
        %v843 = vsel %vm842, 0, %v841
        %v844 = vsub.s32 32, %v843
        %v845 = vshll.u32 %v836, %v843
        %v846 = vshrl.u32 %v828, %v844
        %v847 = vor.u32 %v845, %v846
        %v848 = vsub.s32 4294967266, %v843
        %v849 = vadd.s32 %v848, 127
        %v850 = vshll.u32 %v849, 23
        %v851 = vor.u32 4788187, %v850
        %v852 = vand.u32 2147483647, %v851
        %v854 = vcvt.s32.f32 %v847
        %v855 = vmul.f32 %v854, %v852
        %v856 = vxor.u32 %v855, 2147483648
        %v857 = vsel %vm774, %v856, %v855
        %v858 = vsub.s32 4, %v834
        %v859 = vsel %vm774, %v858, %v834
        %v860 = vsel %vm773, %v747, %v857
        %v861 = vsel %vm773, 0, %v859
        %v862 = vcosq.f32.pop %v860
        %v863 = vsinq.f32.pop %v860
        %vm864 = vweird.f32 %v747
        %v865 = vadd.s32 %v861, 3
        %v866 = vand.u32 %v865, 3
        %vm867 = vcmp.lt.s32.totalorder %v866, 2
        %vm868 = vcmp.eq.s32.totalorder %v866, 0
        %v869 = vxor.u32 %v863, 2147483648
        %v870 = vsel %vm868, %v862, %v869
        %vm871 = vcmp.eq.s32.totalorder %v866, 2
        %v872 = vxor.u32 %v862, 2147483648
        %v873 = vsel %vm871, %v872, %v863
        %v874 = vsel %vm867, %v870, %v873
        %v875 = vsel %vm864, nan, %v874
        %v876 = vand.u32 2147483647, %v749
        %vm877 = vcmp.le.f32.partialorder %v876, 0.7853982
        %vm878 = vcmp.lt.s32.totalorder %v749, 0
        %v879 = vand.u32 %v749, 2139095040
        %v880 = vshrl.u32 %v879, 23
        %v881 = vsub.s32 %v880, 127
        %v882 = vand.u32 2147483647, %v749
        %v883 = vand.u32 %v882, 8388607
        %v884 = vor.u32 %v883, 8388608
        %v885 = vsub.s32 0, %v884
        %v886 = vadd.s32 %v881, 1
        %vm887 = vcmp.gt.s32.totalorder %v886, 0
        %v888 = vsel %vm887, %v886, 0
        %v889 = vshrl.u32 %v888, 5
        %v890 = vand.u32 %v888, 31
        %v891 = vsub.s32 32, %v890
        %v892 = vshrl.u32 683565275, %v891
        %v893 = vshll.u32 683565275, %v890
        %v894 = vshrl.u32 2475754826, %v891
        %v895 = vor.u32 %v893, %v894
        %v896 = vshll.u32 2475754826, %v890
        %v897 = vshrl.u32 2131351028, %v891
        %v898 = vor.u32 %v896, %v897
        %v899 = vshll.u32 2131351028, %v890
        %v900 = vshrl.u32 2102212464, %v891
        %v901 = vor.u32 %v899, %v900
        %v902 = vshll.u32 2102212464, %v890
        %v903 = vshrl.u32 920167782, %v891
        %v904 = vor.u32 %v902, %v903
        %v905 = vshll.u32 920167782, %v890
        %v906 = vshrl.u32 1326507024, %v891
        %v907 = vor.u32 %v905, %v906
        %vm908 = vcmp.lt.s32.totalorder %v889, 1
        %vm909 = vcmp.lt.s32.totalorder %v889, 2
        %vm910 = vcmp.lt.s32.totalorder %v889, 3
        %vm911 = vcmp.lt.s32.totalorder %v889, 4
        %v912 = vsel %vm908, %v892, %v895
        %v913 = vsel %vm911, %v901, 2102212464
        %v914 = vsel %vm910, %v898, %v913
        %v915 = vsel %vm909, %v912, %v914
        %v916 = vsel %vm908, %v895, %v898
        %v917 = vsel %vm911, %v904, 920167782
        %v918 = vsel %vm910, %v901, %v917
        %v919 = vsel %vm909, %v916, %v918
        %v920 = vsel %vm908, %v898, %v901
        %v921 = vsel %vm911, %v907, 1326507024
        %v922 = vsel %vm910, %v904, %v921
        %v923 = vsel %vm909, %v920, %v922
        %v924 = vshll.u32 %v884, 8
        %v925 = vmul.u32.u64.compose %v924, %v923
        %v926 = vextract.low.u32 %v925
        %v927 = vextract.high.u32 %v925
        %v928 = vmul.u32.u64.compose %v924, %v919
        %v929 = vextract.low.u32 %v928
        %v930 = vextract.high.u32 %v928
        %v931 = vmul.u32 %v924, %v915
        %v932 = vadd.s32 %v927, %v929
        %vm933 = vc.u32 %v927, %v929
        %v934 = vadd.s32 %v930, 1
        %v935 = vsel %vm933, %v934, %v930
        %v936 = vadd.s32 %v931, %v935
        %v937 = vadd.s32 %v936, 536870912
        %v938 = vshrl.u32 %v937, 30
        %v939 = vshll.u32 %v938, 30
        %v940 = vsub.s32 %v936, %v939
        %vm941 = vcmp.lt.s32.totalorder %v940, 0
        %v942 = vsub.s32 0, %v940
        %v943 = vsel %vm941, %v942, %v940
        %v944 = vclz %v943
        %v945 = vsub.s32 %v944, 2
        %vm946 = vcmp.gt.s32.totalorder 0, %v945
        %v947 = vsel %vm946, 0, %v945
        %v948 = vsub.s32 32, %v947
        %v949 = vshll.u32 %v940, %v947
        %v950 = vshrl.u32 %v932, %v948
        %v951 = vor.u32 %v949, %v950
        %v952 = vsub.s32 4294967266, %v947
        %v953 = vadd.s32 %v952, 127
        %v954 = vshll.u32 %v953, 23
        %v955 = vor.u32 4788187, %v954
        %v956 = vand.u32 2147483647, %v955
        %v958 = vcvt.s32.f32 %v951
        %v959 = vmul.f32 %v958, %v956
        %v960 = vxor.u32 %v959, 2147483648
        %v961 = vsel %vm878, %v960, %v959
        %v962 = vsub.s32 4, %v938
        %v963 = vsel %vm878, %v962, %v938
        %v964 = vsel %vm877, %v749, %v961
        %v965 = vsel %vm877, 0, %v963
        %v966 = vcosq.f32.pop %v964
        %v967 = vsinq.f32.pop %v964
        %vm968 = vweird.f32 %v749
        %v969 = vadd.s32 %v965, 3
        %v970 = vand.u32 %v969, 3
        %vm971 = vcmp.lt.s32.totalorder %v970, 2
        %vm972 = vcmp.eq.s32.totalorder %v970, 0
        %v973 = vxor.u32 %v967, 2147483648
        %v974 = vsel %vm972, %v966, %v973
        %vm975 = vcmp.eq.s32.totalorder %v970, 2
        %v976 = vxor.u32 %v966, 2147483648
        %v977 = vsel %vm975, %v976, %v967
        %v978 = vsel %vm971, %v974, %v977
        %v979 = vsel %vm968, nan, %v978
        %v980 = vand.u32 2147483647, %v754
        %vm981 = vcmp.le.f32.partialorder %v980, 0.7853982
        %vm982 = vcmp.lt.s32.totalorder %v754, 0
        %v983 = vand.u32 %v754, 2139095040
        %v984 = vshrl.u32 %v983, 23
        %v985 = vsub.s32 %v984, 127
        %v986 = vand.u32 2147483647, %v754
        %v987 = vand.u32 %v986, 8388607
        %v988 = vor.u32 %v987, 8388608
        %v989 = vsub.s32 0, %v988
        %v990 = vadd.s32 %v985, 1
        %vm991 = vcmp.gt.s32.totalorder %v990, 0
        %v992 = vsel %vm991, %v990, 0
        %v993 = vshrl.u32 %v992, 5
        %v994 = vand.u32 %v992, 31
        %v995 = vsub.s32 32, %v994
        %v996 = vshrl.u32 683565275, %v995
        %v997 = vshll.u32 683565275, %v994
        %v998 = vshrl.u32 2475754826, %v995
        %v999 = vor.u32 %v997, %v998
        %v1000 = vshll.u32 2475754826, %v994
        %v1001 = vshrl.u32 2131351028, %v995
        %v1002 = vor.u32 %v1000, %v1001
        %v1003 = vshll.u32 2131351028, %v994
        %v1004 = vshrl.u32 2102212464, %v995
        %v1005 = vor.u32 %v1003, %v1004
        %v1006 = vshll.u32 2102212464, %v994
        %v1007 = vshrl.u32 920167782, %v995
        %v1008 = vor.u32 %v1006, %v1007
        %v1009 = vshll.u32 920167782, %v994
        %v1010 = vshrl.u32 1326507024, %v995
        %v1011 = vor.u32 %v1009, %v1010
        %vm1012 = vcmp.lt.s32.totalorder %v993, 1
        %vm1013 = vcmp.lt.s32.totalorder %v993, 2
        %vm1014 = vcmp.lt.s32.totalorder %v993, 3
        %vm1015 = vcmp.lt.s32.totalorder %v993, 4
        %v1016 = vsel %vm1012, %v996, %v999
        %v1017 = vsel %vm1015, %v1005, 2102212464
        %v1018 = vsel %vm1014, %v1002, %v1017
        %v1019 = vsel %vm1013, %v1016, %v1018
        %v1020 = vsel %vm1012, %v999, %v1002
        %v1021 = vsel %vm1015, %v1008, 920167782
        %v1022 = vsel %vm1014, %v1005, %v1021
        %v1023 = vsel %vm1013, %v1020, %v1022
        %v1024 = vsel %vm1012, %v1002, %v1005
        %v1025 = vsel %vm1015, %v1011, 1326507024
        %v1026 = vsel %vm1014, %v1008, %v1025
        %v1027 = vsel %vm1013, %v1024, %v1026
        %v1028 = vshll.u32 %v988, 8
        %v1029 = vmul.u32.u64.compose %v1028, %v1027
        %v1030 = vextract.low.u32 %v1029
        %v1031 = vextract.high.u32 %v1029
        %v1032 = vmul.u32.u64.compose %v1028, %v1023
        %v1033 = vextract.low.u32 %v1032
        %v1034 = vextract.high.u32 %v1032
        %v1035 = vmul.u32 %v1028, %v1019
        %v1036 = vadd.s32 %v1031, %v1033
        %vm1037 = vc.u32 %v1031, %v1033
        %v1038 = vadd.s32 %v1034, 1
        %v1039 = vsel %vm1037, %v1038, %v1034
        %v1040 = vadd.s32 %v1035, %v1039
        %v1041 = vadd.s32 %v1040, 536870912
        %v1042 = vshrl.u32 %v1041, 30
        %v1043 = vshll.u32 %v1042, 30
        %v1044 = vsub.s32 %v1040, %v1043
        %vm1045 = vcmp.lt.s32.totalorder %v1044, 0
        %v1046 = vsub.s32 0, %v1044
        %v1047 = vsel %vm1045, %v1046, %v1044
        %v1048 = vclz %v1047
        %v1049 = vsub.s32 %v1048, 2
        %vm1050 = vcmp.gt.s32.totalorder 0, %v1049
        %v1051 = vsel %vm1050, 0, %v1049
        %v1052 = vsub.s32 32, %v1051
        %v1053 = vshll.u32 %v1044, %v1051
        %v1054 = vshrl.u32 %v1036, %v1052
        %v1055 = vor.u32 %v1053, %v1054
        %v1056 = vsub.s32 4294967266, %v1051
        %v1057 = vadd.s32 %v1056, 127
        %v1058 = vshll.u32 %v1057, 23
        %v1059 = vor.u32 4788187, %v1058
        %v1060 = vand.u32 2147483647, %v1059
        %v1062 = vcvt.s32.f32 %v1055
        %v1063 = vmul.f32 %v1062, %v1060
        %v1064 = vxor.u32 %v1063, 2147483648
        %v1065 = vsel %vm982, %v1064, %v1063
        %v1066 = vsub.s32 4, %v1042
        %v1067 = vsel %vm982, %v1066, %v1042
        %v1068 = vsel %vm981, %v754, %v1065
        %v1069 = vsel %vm981, 0, %v1067
        %v1070 = vcosq.f32.pop %v1068
        %v1071 = vsinq.f32.pop %v1068
        %vm1072 = vweird.f32 %v754
        %v1073 = vadd.s32 %v1069, 3
        %v1074 = vand.u32 %v1073, 3
        %vm1075 = vcmp.lt.s32.totalorder %v1074, 2
        %vm1076 = vcmp.eq.s32.totalorder %v1074, 0
        %v1077 = vxor.u32 %v1071, 2147483648
        %v1078 = vsel %vm1076, %v1070, %v1077
        %vm1079 = vcmp.eq.s32.totalorder %v1074, 2
        %v1080 = vxor.u32 %v1070, 2147483648
        %v1081 = vsel %vm1079, %v1080, %v1071
        %v1082 = vsel %vm1075, %v1078, %v1081
        %v1083 = vsel %vm1072, nan, %v1082
        %v1084 = vand.u32 2147483647, %v756
        %vm1085 = vcmp.le.f32.partialorder %v1084, 0.7853982
        %vm1086 = vcmp.lt.s32.totalorder %v756, 0
        %v1087 = vand.u32 %v756, 2139095040
        %v1088 = vshrl.u32 %v1087, 23
        %v1089 = vsub.s32 %v1088, 127
        %v1090 = vand.u32 2147483647, %v756
        %v1091 = vand.u32 %v1090, 8388607
        %v1092 = vor.u32 %v1091, 8388608
        %v1093 = vsub.s32 0, %v1092
        %v1094 = vadd.s32 %v1089, 1
        %vm1095 = vcmp.gt.s32.totalorder %v1094, 0
        %v1096 = vsel %vm1095, %v1094, 0
        %v1097 = vshrl.u32 %v1096, 5
        %v1098 = vand.u32 %v1096, 31
        %v1099 = vsub.s32 32, %v1098
        %v1100 = vshrl.u32 683565275, %v1099
        %v1101 = vshll.u32 683565275, %v1098
        %v1102 = vshrl.u32 2475754826, %v1099
        %v1103 = vor.u32 %v1101, %v1102
        %v1104 = vshll.u32 2475754826, %v1098
        %v1105 = vshrl.u32 2131351028, %v1099
        %v1106 = vor.u32 %v1104, %v1105
        %v1107 = vshll.u32 2131351028, %v1098
        %v1108 = vshrl.u32 2102212464, %v1099
        %v1109 = vor.u32 %v1107, %v1108
        %v1110 = vshll.u32 2102212464, %v1098
        %v1111 = vshrl.u32 920167782, %v1099
        %v1112 = vor.u32 %v1110, %v1111
        %v1113 = vshll.u32 920167782, %v1098
        %v1114 = vshrl.u32 1326507024, %v1099
        %v1115 = vor.u32 %v1113, %v1114
        %vm1116 = vcmp.lt.s32.totalorder %v1097, 1
        %vm1117 = vcmp.lt.s32.totalorder %v1097, 2
        %vm1118 = vcmp.lt.s32.totalorder %v1097, 3
        %vm1119 = vcmp.lt.s32.totalorder %v1097, 4
        %v1120 = vsel %vm1116, %v1100, %v1103
        %v1121 = vsel %vm1119, %v1109, 2102212464
        %v1122 = vsel %vm1118, %v1106, %v1121
        %v1123 = vsel %vm1117, %v1120, %v1122
        %v1124 = vsel %vm1116, %v1103, %v1106
        %v1125 = vsel %vm1119, %v1112, 920167782
        %v1126 = vsel %vm1118, %v1109, %v1125
        %v1127 = vsel %vm1117, %v1124, %v1126
        %v1128 = vsel %vm1116, %v1106, %v1109
        %v1129 = vsel %vm1119, %v1115, 1326507024
        %v1130 = vsel %vm1118, %v1112, %v1129
        %v1131 = vsel %vm1117, %v1128, %v1130
        %v1132 = vshll.u32 %v1092, 8
        %v1133 = vmul.u32.u64.compose %v1132, %v1131
        %v1134 = vextract.low.u32 %v1133
        %v1135 = vextract.high.u32 %v1133
        %v1136 = vmul.u32.u64.compose %v1132, %v1127
        %v1137 = vextract.low.u32 %v1136
        %v1138 = vextract.high.u32 %v1136
        %v1139 = vmul.u32 %v1132, %v1123
        %v1140 = vadd.s32 %v1135, %v1137
        %vm1141 = vc.u32 %v1135, %v1137
        %v1142 = vadd.s32 %v1138, 1
        %v1143 = vsel %vm1141, %v1142, %v1138
        %v1144 = vadd.s32 %v1139, %v1143
        %v1145 = vadd.s32 %v1144, 536870912
        %v1146 = vshrl.u32 %v1145, 30
        %v1147 = vshll.u32 %v1146, 30
        %v1148 = vsub.s32 %v1144, %v1147
        %vm1149 = vcmp.lt.s32.totalorder %v1148, 0
        %v1150 = vsub.s32 0, %v1148
        %v1151 = vsel %vm1149, %v1150, %v1148
        %v1152 = vclz %v1151
        %v1153 = vsub.s32 %v1152, 2
        %vm1154 = vcmp.gt.s32.totalorder 0, %v1153
        %v1155 = vsel %vm1154, 0, %v1153
        %v1156 = vsub.s32 32, %v1155
        %v1157 = vshll.u32 %v1148, %v1155
        %v1158 = vshrl.u32 %v1140, %v1156
        %v1159 = vor.u32 %v1157, %v1158
        %v1160 = vsub.s32 4294967266, %v1155
        %v1161 = vadd.s32 %v1160, 127
        %v1162 = vshll.u32 %v1161, 23
        %v1163 = vor.u32 4788187, %v1162
        %v1164 = vand.u32 2147483647, %v1163
        %v1166 = vcvt.s32.f32 %v1159
        %v1167 = vmul.f32 %v1166, %v1164
        %v1168 = vxor.u32 %v1167, 2147483648
        %v1169 = vsel %vm1086, %v1168, %v1167
        %v1170 = vsub.s32 4, %v1146
        %v1171 = vsel %vm1086, %v1170, %v1146
        %v1172 = vsel %vm1085, %v756, %v1169
        %v1173 = vsel %vm1085, 0, %v1171
        %v1174 = vcosq.f32.pop %v1172
        %v1175 = vsinq.f32.pop %v1172
        %vm1176 = vweird.f32 %v756
        %v1177 = vadd.s32 %v1173, 3
        %v1178 = vand.u32 %v1177, 3
        %vm1179 = vcmp.lt.s32.totalorder %v1178, 2
        %vm1180 = vcmp.eq.s32.totalorder %v1178, 0
        %v1181 = vxor.u32 %v1175, 2147483648
        %v1182 = vsel %vm1180, %v1174, %v1181
        %vm1183 = vcmp.eq.s32.totalorder %v1178, 2
        %v1184 = vxor.u32 %v1174, 2147483648
        %v1185 = vsel %vm1183, %v1184, %v1175
        %v1186 = vsel %vm1179, %v1182, %v1185
        %v1187 = vsel %vm1176, nan, %v1186
        %v1188 = vmul.f32 %v761, 1.442695
        %v1189 = vpow.pop %v1188
        %v1190 = vmul.f32 %v763, 1.442695
        %v1191 = vpow.pop %v1190
        %v1192 = vmul.f32 %v768, 1.442695
        %v1193 = vpow.pop %v1192
        %v1194 = vmul.f32 %v770, 1.442695
        %v1195 = vpow.pop %v1194
        %v1196 = vmul.f32 %v875, %v1189
        %v1197 = vmul.f32 %v979, %v1191
        %v1198 = vmul.f32 %v1083, %v1193
        %v1199 = vmul.f32 %v1187, %v1195
        %1200 = vst [vmem:[%s133] sm:$0xff] %v1196
        %1201 = vst [vmem:[%s133 + $0x8] sm:$0xff] %v1197
        %1202 = vst [vmem:[%s133 + $0x10] sm:$0xff] %v1198
        %1203 = vst [vmem:[%s133 + $0x18] sm:$0xff] %v1199
        %s1204 = sand.u32 %s68, 1
        %s1205 = sand.u32 %s68, 1
        %s1206 = smul.addr %s1205, 32
        %s1207 = scalar_lea.vmem [#allocation2], %s1206
        // Predicated region
        $region29: #{regular_herglotz_pe.1} parent=27 // pred_check
          %p1208 = pneg %p78
        $region30: #{regular_herglotz_pe.1} parent=27 // pred_check_branch
          %1210 = sbr.rel (%p1208) target = $region32
        $region31: #{regular_herglotz_pe.1} parent=27 // pred_region
          %s1211 = smul.u32 2, %s13
          %s1212 = smul.addr %s1211, 8
          %s1213 = scalar_lea.vmem %s2, %s1212
          // Predicated region
          $region33: #{regular_herglotz_pe.1} parent=31 // pred_check
            _
          $region34: #{regular_herglotz_pe.1} parent=31 // pred_check_branch
            %1215 = sbr.rel (0) target = $region36
          $region35: #{regular_herglotz_pe.1} parent=31 // pred_region
            // Predicated region
            $region37: #{regular_herglotz_pe.1} parent=35 // pred_check
              _
            $region38: #{regular_herglotz_pe.1} parent=35 // pred_check_branch
              %1217 = sbr.rel (0) target = $region40
            $region39: #{regular_herglotz_pe.1} parent=35 // pred_region
              loop: start=0, step=1, limit=1
              $region41: #{regular_herglotz_pe.1} parent=39 // loop_pre_header
                _
              $region42: #{regular_herglotz_pe.1} parent=39 // loop_header
                %s1219 = sphi 0, %s1223
                %p1220 = scmp.ge.s32.totalorder %s1219, 1
                %s1224 = sphi %s1207, %s1207
                %s1225 = sphi %s1213, %s1213
              $region43: #{regular_herglotz_pe.1} parent=39 // loop_header_branch
                %1222 = sbr.rel (%p1220) target = $region47
              $region44: #{regular_herglotz_pe.1} parent=39 // loop_body
                %v1226 = vld [vmem:[%s1224] sm:$0xff]
                %1227 = vst [vmem:[%s1225] sm:$0xff] %v1226
                %v1228 = vld [vmem:[%s1224 + $0x8] sm:$0xff]
                %1229 = vst [vmem:[%s1225 + $0x8] sm:$0xff] %v1228
                %v1230 = vld [vmem:[%s1224 + $0x10] sm:$0xff]
                %1231 = vst [vmem:[%s1225 + $0x20] sm:$0xff] %v1230
                %v1232 = vld [vmem:[%s1224 + $0x18] sm:$0xff]
                %1233 = vst [vmem:[%s1225 + $0x28] sm:$0xff] %v1232
              $region45: #{regular_herglotz_pe.1} parent=39 // loop_footer
                %s1223 = sadd.s32 1, %s1219
              $region46: #{regular_herglotz_pe.1} parent=39 // loop_footer_branch
                %1218 = sbr.rel target = $region42
              $region47: #{regular_herglotz_pe.1} parent=39 // loop_exit
                _
            $region40: #{regular_herglotz_pe.1} parent=35 // pred_fallthru
              _
            // Predicated region
            $region48: #{regular_herglotz_pe.1} parent=35 // pred_check
              _
            $region49: #{regular_herglotz_pe.1} parent=35 // pred_check_branch
              %1235 = sbr.rel target = $region51
            $region50: #{regular_herglotz_pe.1} parent=35 // pred_region
              _
            $region51: #{regular_herglotz_pe.1} parent=35 // pred_fallthru
              _
          $region36: #{regular_herglotz_pe.1} parent=31 // pred_fallthru
            _
          %1236 = vnop
        $region32: #{regular_herglotz_pe.1} parent=27 // pred_fallthru
          _
      $region28: #{regular_herglotz_pe.1} parent=5 // pred_fallthru
        _
      %p1237 = scmp.le.s32.totalorder 2, %s8
      // Predicated region
      $region52: #{regular_herglotz_pe.1} parent=5 // pred_check
        %p1238 = pneg %p1237
      $region53: #{regular_herglotz_pe.1} parent=5 // pred_check_branch
        %1240 = sbr.rel (%p1238) target = $region55
      $region54: #{regular_herglotz_pe.1} parent=5 // pred_region
        %s1241 = ssub.s32 %s8, 2
        // Predicated region
        $region56: #{regular_herglotz_pe.1} parent=54 // pred_check
          %p1242 = pneg %p84
        $region57: #{regular_herglotz_pe.1} parent=54 // pred_check_branch
          %1244 = sbr.rel (%p1242) target = $region59
        $region58: #{regular_herglotz_pe.1} parent=54 // pred_region
          %s1245 = sand.u32 %s69, 1
          %s1246 = sand.u32 %s69, 1
          %s1247 = smul.addr %s1246, 32
          %s1248 = scalar_lea.vmem [#allocation2], %s1247
        $region59: #{regular_herglotz_pe.1} parent=54 // pred_fallthru
          _
      $region55: #{regular_herglotz_pe.1} parent=5 // pred_fallthru
        _
    $region6: #{regular_herglotz_pe.1} parent=1 // loop_footer
      %s12 = sadd.s32 1, %s8
    $region7: #{regular_herglotz_pe.1} parent=1 // loop_footer_branch
      %7 = sbr.rel target = $region3
    $region8: #{regular_herglotz_pe.1} parent=1 // loop_exit
      _

</llo_original>
